<compile_context>
chip_gen: v5e
topology: v5e:2x2
jax: 0.10.0
libtpu: 0.0.40
codegen_flags: <defaults>
</compile_context>

<pallas_src>
import jax
import jax.numpy as jnp
from jax.experimental import pallas as pl
from jax.experimental.pallas import tpu as pltpu


def _round_up(x: int, m: int) -> int:
    return ((x + m - 1) // m) * m


def _default_act_dtype():
    """bf16 inter-layer activations on v6e/v7x (bf16 VPU/EUP), f32 elsewhere (v5e)."""
    try:
        dev = jax.devices()[0]
        if dev.platform != "tpu":
            return jnp.float32
        kind = dev.device_kind.lower()
    except Exception:
        return jnp.float32
    if "v6" in kind or "v7" in kind or "7x" in kind:
        return jnp.bfloat16
    return jnp.float32


def _make_ae_kernel(n_enc: int, n_dec: int, act_dtype):
    """Fuses all encoder/decoder linears + L2-normalize for one batch tile."""

    def kernel(x_ref, *refs):
        # refs = (w_e0, b_e0, ..., w_d0, b_d0, ..., out_ref)
        out_ref = refs[-1]
        params = refs[:-1]

        h = x_ref[...]

        idx = 0
        # ---- encoder ----
        for i in range(n_enc):
            w = params[idx][...]                               # [in_p, out_p] (bf16)
            b = params[idx + 1][...].astype(act_dtype)         # [1, out_p]
            idx += 2
            y = jnp.dot(h.astype(w.dtype), w,
                        preferred_element_type=jnp.float32)    # f32 MXU accumulation
            y = y.astype(act_dtype) + b
            if i != n_enc - 1:
                y = jnp.maximum(y, 0.0)                        # ReLU (not on last)
            h = y

        # ---- F.normalize(h, p=2, dim=1) ----
        # h / max(||h||, 1e-12) == h * rsqrt(max(||h||^2, 1e-24)); rsqrt -> EUP.
        # Padded bottleneck columns are exactly zero, so they do not perturb ss.
        hf = h.astype(jnp.float32)
        ss = jnp.sum(hf * hf, axis=1, keepdims=True)
        h = (hf * jax.lax.rsqrt(jnp.maximum(ss, 1e-24))).astype(act_dtype)

        # ---- decoder ----
        for i in range(n_dec):
            w = params[idx][...]
            b = params[idx + 1][...].astype(act_dtype)
            idx += 2
            y = jnp.dot(h.astype(w.dtype), w,
                        preferred_element_type=jnp.float32)
            y = y.astype(act_dtype) + b
            if i != n_dec - 1:
                y = jnp.maximum(y, 0.0)                        # ReLU (not on last)
            h = y

        out_ref[...] = h.astype(out_ref.dtype)                 # lane-dense (128-mult) store

    return kernel


def autoencoder_forward(x, enc_params, dec_params, *, block_batch: int = 512,
                        act_dtype=None):
    """x: [B, dims[0]].  enc_params/dec_params: lists of (W[in,out], b[1,out])."""
    if act_dtype is None:
        act_dtype = _default_act_dtype()

    B, d0 = x.shape
    n_enc = len(enc_params)
    n_dec = len(dec_params)
    kernel = _make_ae_kernel(n_enc, n_dec, act_dtype)

    # --- Zero-pad every feature / contraction dim to a multiple of 128 ------
    # Exact: padded W rows meet zero input columns; padded W cols + zero bias
    # produce zero output columns that stay zero through ReLU / normalize.
    d0_pad = _round_up(d0, 128)
    flat = []
    layer_dims_padded = []
    for (w, b) in enc_params + dec_params:
        fin, fout = w.shape
        fin_p, fout_p = _round_up(fin, 128), _round_up(fout, 128)
        w_p = jnp.pad(w, ((0, fin_p - fin), (0, fout_p - fout)))
        b_p = jnp.pad(b, ((0, 0), (0, fout_p - fout)))
        flat.extend([w_p, b_p])
        layer_dims_padded.append((fin_p, fout_p))

    x_p = x if d0_pad == d0 else jnp.pad(x, ((0, 0), (0, d0_pad - d0)))

    # --- Batch tile -----------------------------------------------------------
    # Multiple of 8 sublanes; default 512 (>= 85% of HBM roofline on mem-bound
    # tiles, multiple of 128 for v5e MXU height); never larger than the batch,
    # and capped at ceil(B/2) so ("parallel",) can shard across v7x's 2 TCs.
    half = pl.cdiv(B, 2)
    half = _round_up(half, 128 if half >= 128 else 8)
    tb = max(8, min(block_batch, _round_up(B, 8), half))
    b_pad = _round_up(B, tb)
    if b_pad != B:
        x_p = jnp.pad(x_p, ((0, b_pad - B), (0, 0)))
    grid = (b_pad // tb,)

    # x / out tiled over batch; parameters use constant index_maps so they are
    # DMA'd once and stay VMEM-resident for the whole batch loop.
    x_spec = pl.BlockSpec((tb, d0_pad), lambda i: (i, 0))
    out_spec = pl.BlockSpec((tb, d0_pad), lambda i: (i, 0))
    param_specs = [pl.BlockSpec(p.shape, lambda i: (0, 0)) for p in flat]

    # --- VMEM budget ----------------------------------------------------------
    # Params are double-buffered by Pallas (constant index => re-DMA is skipped
    # but two buffers are still allocated): count them 2x.  I/O tiles are
    # double-buffered too.  Allow exceeding 32 MiB only when the re-derived
    # need demands it; hard cap 48 MiB (v7x physical VMEM is 64 MiB / TC).
    param_bytes = sum(int(p.size) * p.dtype.itemsize for p in flat)
    widest = max([d0_pad] + [fo for (_, fo) in layer_dims_padded])
    act_itemsize = max(4, jnp.dtype(act_dtype).itemsize)   # f32 temporaries around normalize
    act_bytes = 6 * tb * widest * act_itemsize
    io_bytes = 2 * 2 * tb * d0_pad * x.dtype.itemsize
    vmem_need = 2 * param_bytes + io_bytes + act_bytes
    vmem_limit = int(min(48 << 20, max(16 << 20, int(vmem_need * 1.25))))

    # Cost hint for XLA's scheduler (padded dims = what actually executes).
    flops = sum(2 * b_pad * fi * fo for (fi, fo) in layer_dims_padded)
    bytes_accessed = 2 * b_pad * d0_pad * x.dtype.itemsize + param_bytes
    cost = pl.CostEstimate(flops=flops, transcendentals=b_pad,
                           bytes_accessed=bytes_accessed)

    out = pl.pallas_call(
        kernel,
        out_shape=jax.ShapeDtypeStruct((b_pad, d0_pad), x.dtype),
        grid_spec=pltpu.PrefetchScalarGridSpec(
            num_scalar_prefetch=0,
            grid=grid,
            in_specs=[x_spec] + param_specs,
            out_specs=out_spec,
        ),
        compiler_params=pltpu.CompilerParams(
            dimension_semantics=("parallel",),
            vmem_limit_bytes=vmem_limit,
        ),
        cost_estimate=cost,
    )(x_p, *flat)

    return out[:B, :d0]


def _init_linear(key, fan_in, fan_out, param_dtype):
    """Deterministic init mirroring torch.nn.Linear default (kaiming-uniform-ish)."""
    kw, kb = jax.random.split(key)
    bound = 1.0 / jnp.sqrt(float(fan_in))
    # Stored already transposed to [in, out] for the kernel; weights in bf16
    # (MXU-native), biases kept in f32 (tiny; cast in-kernel).
    w = jax.random.uniform(kw, (fan_in, fan_out), jnp.float32, -bound, bound)
    b = jax.random.uniform(kb, (1, fan_out), jnp.float32, -bound, bound)
    return w.astype(param_dtype), b


def build_params(key, dims, param_dtype=jnp.bfloat16):
    """Encoder: dims[i] -> dims[i+1];  Decoder (reversed): dims[i+1] -> dims[i]."""
    n_layers = len(dims) - 1
    keys = jax.random.split(key, 2 * n_layers)
    enc_params = []
    for i in range(n_layers):
        enc_params.append(_init_linear(keys[i], dims[i], dims[i + 1], param_dtype))
    dec_params = []
    for j, i in enumerate(reversed(range(n_layers))):
        dec_params.append(_init_linear(keys[n_layers + j], dims[i + 1], dims[i], param_dtype))
    return enc_params, dec_params


def reference_forward(x, enc_params, dec_params, act_dtype):
    """Pure-JAX reference mirroring the kernel's mixed-precision math (unpadded)."""
    h = x
    for i, (w, b) in enumerate(enc_params):
        h = jnp.dot(h.astype(w.dtype), w,
                    preferred_element_type=jnp.float32).astype(act_dtype) + b.astype(act_dtype)
        if i != len(enc_params) - 1:
            h = jnp.maximum(h, 0.0)
    hf = h.astype(jnp.float32)
    ss = jnp.sum(hf * hf, axis=1, keepdims=True)
    h = (hf * jax.lax.rsqrt(jnp.maximum(ss, 1e-24))).astype(act_dtype)
    for i, (w, b) in enumerate(dec_params):
        h = jnp.dot(h.astype(w.dtype), w,
                    preferred_element_type=jnp.float32).astype(act_dtype) + b.astype(act_dtype)
        if i != len(dec_params) - 1:
            h = jnp.maximum(h, 0.0)
    return h.astype(x.dtype)


if __name__ == "__main__":
    # Small DEC-style dims: input 64 -> 32 -> 16 (bottleneck), mirrored decoder.
    dims = [64, 32, 16]
    batch = 8

    key = jax.random.PRNGKey(0)
    k_x, k_p = jax.random.split(key)
    x = jax.random.normal(k_x, (batch, dims[0]), jnp.float32)

    enc_params, dec_params = build_params(k_p, dims)
    act_dtype = _default_act_dtype()

    out = autoencoder_forward(x, enc_params, dec_params, act_dtype=act_dtype)
    out = jax.block_until_ready(out)

    ref = reference_forward(x, enc_params, dec_params, act_dtype)
    assert out.shape == (batch, dims[0])
    tol = 3e-2 if act_dtype == jnp.bfloat16 else 2e-3
    assert jnp.allclose(out, ref, atol=tol, rtol=tol), "mismatch vs reference"

    print("KERNEL_OK")
</pallas_src>

<mosaic_0001>
module attributes {stable_mosaic.version = 11 : i64} {
  func.func @kernel(%arg0: i32, %arg1: memref<8x128xf32, #tpu.memory_space<vmem>>, %arg2: memref<128x128xbf16, #tpu.memory_space<vmem>>, %arg3: memref<1x128xf32, #tpu.memory_space<vmem>>, %arg4: memref<128x128xbf16, #tpu.memory_space<vmem>>, %arg5: memref<1x128xf32, #tpu.memory_space<vmem>>, %arg6: memref<128x128xbf16, #tpu.memory_space<vmem>>, %arg7: memref<1x128xf32, #tpu.memory_space<vmem>>, %arg8: memref<128x128xbf16, #tpu.memory_space<vmem>>, %arg9: memref<1x128xf32, #tpu.memory_space<vmem>>, %arg10: memref<8x128xf32, #tpu.memory_space<vmem>>) attributes {dimension_semantics = [#tpu.dimension_semantics<parallel>], iteration_bounds = array<i64: 1>, scalar_prefetch = 0 : i64, scratch_operands = 0 : i64, tpu.core_type = #tpu.core_type<tc>, window_params = [{transform_indices = @transform_0, window_bounds = array<i64: 8, 128>}, {pipeline_mode = #tpu.pipeline_mode<synchronous>, transform_indices = @transform_1, window_bounds = array<i64: 128, 128>}, {pipeline_mode = #tpu.pipeline_mode<synchronous>, transform_indices = @transform_2, window_bounds = array<i64: 1, 128>}, {pipeline_mode = #tpu.pipeline_mode<synchronous>, transform_indices = @transform_3, window_bounds = array<i64: 128, 128>}, {pipeline_mode = #tpu.pipeline_mode<synchronous>, transform_indices = @transform_4, window_bounds = array<i64: 1, 128>}, {pipeline_mode = #tpu.pipeline_mode<synchronous>, transform_indices = @transform_5, window_bounds = array<i64: 128, 128>}, {pipeline_mode = #tpu.pipeline_mode<synchronous>, transform_indices = @transform_6, window_bounds = array<i64: 1, 128>}, {pipeline_mode = #tpu.pipeline_mode<synchronous>, transform_indices = @transform_7, window_bounds = array<i64: 128, 128>}, {pipeline_mode = #tpu.pipeline_mode<synchronous>, transform_indices = @transform_8, window_bounds = array<i64: 1, 128>}, {transform_indices = @transform_9, window_bounds = array<i64: 8, 128>}]} {
    %c0 = arith.constant 0 : index
    %c0_0 = arith.constant 0 : index
    %0 = vector.load %arg1[%c0, %c0_0] : memref<8x128xf32, #tpu.memory_space<vmem>>, vector<8x128xf32>
    %c0_1 = arith.constant 0 : index
    %c0_2 = arith.constant 0 : index
    %1 = vector.load %arg2[%c0_1, %c0_2] : memref<128x128xbf16, #tpu.memory_space<vmem>>, vector<128x128xbf16>
    %c0_3 = arith.constant 0 : index
    %c0_4 = arith.constant 0 : index
    %2 = vector.load %arg3[%c0_3, %c0_4] : memref<1x128xf32, #tpu.memory_space<vmem>>, vector<1x128xf32>
    %3 = arith.truncf %0 : vector<8x128xf32> to vector<8x128xbf16>
    %cst = arith.constant dense<0.000000e+00> : vector<8x128xf32>
    %4 = tpu.matmul %3, %1, %cst {dimension_numbers = #tpu.dot_dimension_numbers<[1], [0], [0], [1], [0, 0, 1, 1], [], []>} : vector<8x128xbf16>, vector<128x128xbf16>, vector<8x128xf32> -> vector<8x128xf32>
    %5 = vector.broadcast %2 : vector<1x128xf32> to vector<8x128xf32>
    %6 = arith.addf %4, %5 : vector<8x128xf32>
    %cst_5 = arith.constant 0.000000e+00 : f32
    %7 = vector.broadcast %cst_5 : f32 to vector<8x128xf32>
    %8 = arith.maximumf %6, %7 : vector<8x128xf32>
    %c0_6 = arith.constant 0 : index
    %c0_7 = arith.constant 0 : index
    %9 = vector.load %arg4[%c0_6, %c0_7] : memref<128x128xbf16, #tpu.memory_space<vmem>>, vector<128x128xbf16>
    %c0_8 = arith.constant 0 : index
    %c0_9 = arith.constant 0 : index
    %10 = vector.load %arg5[%c0_8, %c0_9] : memref<1x128xf32, #tpu.memory_space<vmem>>, vector<1x128xf32>
    %11 = arith.truncf %8 : vector<8x128xf32> to vector<8x128xbf16>
    %cst_10 = arith.constant dense<0.000000e+00> : vector<8x128xf32>
    %12 = tpu.matmul %11, %9, %cst_10 {dimension_numbers = #tpu.dot_dimension_numbers<[1], [0], [0], [1], [0, 0, 1, 1], [], []>} : vector<8x128xbf16>, vector<128x128xbf16>, vector<8x128xf32> -> vector<8x128xf32>
    %13 = vector.broadcast %10 : vector<1x128xf32> to vector<8x128xf32>
    %14 = arith.addf %12, %13 : vector<8x128xf32>
    %15 = arith.mulf %14, %14 : vector<8x128xf32>
    %cst_11 = arith.constant dense<0.000000e+00> : vector<8xf32>
    %16 = vector.multi_reduction <add>, %15, %cst_11 [1] : vector<8x128xf32> to vector<8xf32>
    %17 = vector.shape_cast %16 : vector<8xf32> to vector<8x1xf32>
    %cst_12 = arith.constant 1.000000e-24 : f32
    %18 = vector.broadcast %cst_12 : f32 to vector<8x1xf32>
    %19 = arith.maximumf %17, %18 : vector<8x1xf32>
    %20 = math.rsqrt %19 : vector<8x1xf32>
    %21 = vector.broadcast %20 : vector<8x1xf32> to vector<8x128xf32>
    %22 = arith.mulf %14, %21 : vector<8x128xf32>
    %c0_13 = arith.constant 0 : index
    %c0_14 = arith.constant 0 : index
    %23 = vector.load %arg6[%c0_13, %c0_14] : memref<128x128xbf16, #tpu.memory_space<vmem>>, vector<128x128xbf16>
    %c0_15 = arith.constant 0 : index
    %c0_16 = arith.constant 0 : index
    %24 = vector.load %arg7[%c0_15, %c0_16] : memref<1x128xf32, #tpu.memory_space<vmem>>, vector<1x128xf32>
    %25 = arith.truncf %22 : vector<8x128xf32> to vector<8x128xbf16>
    %cst_17 = arith.constant dense<0.000000e+00> : vector<8x128xf32>
    %26 = tpu.matmul %25, %23, %cst_17 {dimension_numbers = #tpu.dot_dimension_numbers<[1], [0], [0], [1], [0, 0, 1, 1], [], []>} : vector<8x128xbf16>, vector<128x128xbf16>, vector<8x128xf32> -> vector<8x128xf32>
    %27 = vector.broadcast %24 : vector<1x128xf32> to vector<8x128xf32>
    %28 = arith.addf %26, %27 : vector<8x128xf32>
    %cst_18 = arith.constant 0.000000e+00 : f32
    %29 = vector.broadcast %cst_18 : f32 to vector<8x128xf32>
    %30 = arith.maximumf %28, %29 : vector<8x128xf32>
    %c0_19 = arith.constant 0 : index
    %c0_20 = arith.constant 0 : index
    %31 = vector.load %arg8[%c0_19, %c0_20] : memref<128x128xbf16, #tpu.memory_space<vmem>>, vector<128x128xbf16>
    %c0_21 = arith.constant 0 : index
    %c0_22 = arith.constant 0 : index
    %32 = vector.load %arg9[%c0_21, %c0_22] : memref<1x128xf32, #tpu.memory_space<vmem>>, vector<1x128xf32>
    %33 = arith.truncf %30 : vector<8x128xf32> to vector<8x128xbf16>
    %cst_23 = arith.constant dense<0.000000e+00> : vector<8x128xf32>
    %34 = tpu.matmul %33, %31, %cst_23 {dimension_numbers = #tpu.dot_dimension_numbers<[1], [0], [0], [1], [0, 0, 1, 1], [], []>} : vector<8x128xbf16>, vector<128x128xbf16>, vector<8x128xf32> -> vector<8x128xf32>
    %35 = vector.broadcast %32 : vector<1x128xf32> to vector<8x128xf32>
    %36 = arith.addf %34, %35 : vector<8x128xf32>
    %c0_24 = arith.constant 0 : index
    %c0_25 = arith.constant 0 : index
    %37 = vector.load %arg10[%c0_24, %c0_25] : memref<8x128xf32, #tpu.memory_space<vmem>>, vector<8x128xf32>
    tpu.vector_store %arg10[%c0_24, %c0_25], %36 {strides = array<i32>} : memref<8x128xf32, #tpu.memory_space<vmem>>, vector<8x128xf32>,
    return
  }
  func.func @transform_0(%arg0: i32) -> (i32, i32) {
    %c0_i32 = arith.constant 0 : i32
    %c0_i32_0 = arith.constant 0 : i32
    return %arg0, %c0_i32 : i32, i32
  }
  func.func @transform_1(%arg0: i32) -> (i32, i32) {
    %c0_i32 = arith.constant 0 : i32
    %c0_i32_0 = arith.constant 0 : i32
    %c0_i32_1 = arith.constant 0 : i32
    return %c0_i32, %c0_i32_0 : i32, i32
  }
  func.func @transform_2(%arg0: i32) -> (i32, i32) {
    %c0_i32 = arith.constant 0 : i32
    %c0_i32_0 = arith.constant 0 : i32
    %c0_i32_1 = arith.constant 0 : i32
    return %c0_i32, %c0_i32_0 : i32, i32
  }
  func.func @transform_3(%arg0: i32) -> (i32, i32) {
    %c0_i32 = arith.constant 0 : i32
    %c0_i32_0 = arith.constant 0 : i32
    %c0_i32_1 = arith.constant 0 : i32
    return %c0_i32, %c0_i32_0 : i32, i32
  }
  func.func @transform_4(%arg0: i32) -> (i32, i32) {
    %c0_i32 = arith.constant 0 : i32
    %c0_i32_0 = arith.constant 0 : i32
    %c0_i32_1 = arith.constant 0 : i32
    return %c0_i32, %c0_i32_0 : i32, i32
  }
  func.func @transform_5(%arg0: i32) -> (i32, i32) {
    %c0_i32 = arith.constant 0 : i32
    %c0_i32_0 = arith.constant 0 : i32
    %c0_i32_1 = arith.constant 0 : i32
    return %c0_i32, %c0_i32_0 : i32, i32
  }
  func.func @transform_6(%arg0: i32) -> (i32, i32) {
    %c0_i32 = arith.constant 0 : i32
    %c0_i32_0 = arith.constant 0 : i32
    %c0_i32_1 = arith.constant 0 : i32
    return %c0_i32, %c0_i32_0 : i32, i32
  }
  func.func @transform_7(%arg0: i32) -> (i32, i32) {
    %c0_i32 = arith.constant 0 : i32
    %c0_i32_0 = arith.constant 0 : i32
    %c0_i32_1 = arith.constant 0 : i32
    return %c0_i32, %c0_i32_0 : i32, i32
  }
  func.func @transform_8(%arg0: i32) -> (i32, i32) {
    %c0_i32 = arith.constant 0 : i32
    %c0_i32_0 = arith.constant 0 : i32
    %c0_i32_1 = arith.constant 0 : i32
    return %c0_i32, %c0_i32_0 : i32, i32
  }
  func.func @transform_9(%arg0: i32) -> (i32, i32) {
    %c0_i32 = arith.constant 0 : i32
    %c0_i32_0 = arith.constant 0 : i32
    return %arg0, %c0_i32 : i32, i32
  }
}

</mosaic_0001>

<llo_original>
// kernel: tpu_custom_call.1
$region0: #{tpu_custom_call.1}
  #allocation0 [shape = 'u32[]', space=smem, size = 0x4, offset = 0x4, fixed_abs, tag = 'smem constant byte address 0x4 - core index']
  #allocation1 [shape = 'u32[72,128]{1,0:T(1,128)}', space=vmem, size = 0x9000, scoped, tag = 'internal scratch']
  %s0 = inlined_call_operand.hbm [shape: f32[8,128], index: 0, kind: input, shape index: {}]
  %s1 = inlined_call_operand.hbm [shape: bf16[128,128], index: 1, kind: input, shape index: {}]
  %s2 = inlined_call_operand.vmem [shape: f32[1,128], index: 2, kind: input, shape index: {}]
  %s3 = inlined_call_operand.hbm [shape: bf16[128,128], index: 3, kind: input, shape index: {}]
  %s4 = inlined_call_operand.vmem [shape: f32[1,128], index: 4, kind: input, shape index: {}]
  %s5 = inlined_call_operand.hbm [shape: bf16[128,128], index: 5, kind: input, shape index: {}]
  %s6 = inlined_call_operand.vmem [shape: f32[1,128], index: 6, kind: input, shape index: {}]
  %s7 = inlined_call_operand.hbm [shape: bf16[128,128], index: 7, kind: input, shape index: {}]
  %s8 = inlined_call_operand.vmem [shape: f32[1,128], index: 8, kind: input, shape index: {}]
  %s9 = inlined_call_operand.hbm [shape: f32[8,128], index: 9, kind: output, shape index: {}]
  %s10 = sld [smem:[#allocation0]]
  $region66: #{tpu_custom_call.1} parent=0
    _
  %s12 = ssub.s32 1, %s10
  %s13 = scalar_select 0, %s12, %s10
  $region1: #{tpu_custom_call.1} parent=0
    #allocation2 [shape = 'u8[4096]{0}', space=vmem, size = 0x1000, scoped, tag = 'input window, operand 0, single buffered']
    #allocation3 [shape = 's32[1]{0}', space=sflag, size = 0x4, scoped, tag = 'scoped memory for tpu_custom_call.1']
    #allocation4 [shape = 's32[1]{0}', space=sflag, size = 0x4, scoped, tag = 'scoped memory for tpu_custom_call.1']
    #allocation5 [shape = 'u8[32768]{0}', space=vmem, size = 0x8000, scoped, tag = 'input window, operand 1, single buffered']
    #allocation6 [shape = 's32[1]{0}', space=sflag, size = 0x4, scoped, tag = 'scoped memory for tpu_custom_call.1']
    #allocation7 [shape = 'u8[32768]{0}', space=vmem, size = 0x8000, scoped, tag = 'input window, operand 3, single buffered']
    #allocation8 [shape = 'u8[32768]{0}', space=vmem, size = 0x8000, scoped, tag = 'input window, operand 5, single buffered']
    #allocation9 [shape = 's32[1]{0}', space=sflag, size = 0x4, scoped, tag = 'scoped memory for tpu_custom_call.1']
    #allocation10 [shape = 'u8[32768]{0}', space=vmem, size = 0x8000, scoped, tag = 'input window, operand 7, single buffered']
    #allocation11 [shape = 'u8[4096]{0}', space=vmem, size = 0x1000, scoped, tag = 'output window, operand 0, single buffered']
    %14 = vsyncpa [#allocation3], 0
    %15 = vsyncpa [#allocation6], 0
    %16 = vsyncpa [#allocation9], 0
    %17 = vsyncpa [#allocation4], 0
    // Predicated region
    $region2: #{tpu_custom_call.1} parent=1 // pred_check
      _
    $region3: #{tpu_custom_call.1} parent=1 // pred_check_branch
      %19 = sbr.rel (0) target = $region5
    $region4: #{tpu_custom_call.1} parent=1 // pred_region
      %21 = vsyncadd [#allocation3], 0
      %s23 = sshll.u32 %s0, 4
      %s24 = int_to_ptr.hbm [resolvable:$true] %s23
      %s25 = sshll.u32 [#allocation2], 4
      %s26 = int_to_ptr.vmem [resolvable:$true] %s25
      %28 = dma.hbm_to_vmem [thread:$0]  %s24, 128, %s26, [#allocation3]
    $region5: #{tpu_custom_call.1} parent=1 // pred_fallthru
      _
    // Predicated region
    $region6: #{tpu_custom_call.1} parent=1 // pred_check
      _
    $region7: #{tpu_custom_call.1} parent=1 // pred_check_branch
      %30 = sbr.rel (0) target = $region9
    $region8: #{tpu_custom_call.1} parent=1 // pred_region
      %32 = vsyncadd [#allocation6], 0
      %s33 = sshll.u32 %s1, 4
      %s34 = int_to_ptr.hbm [resolvable:$true] %s33
      %s35 = sshll.u32 [#allocation5], 4
      %s36 = int_to_ptr.vmem [resolvable:$true] %s35
      %41 = dma.hbm_to_vmem [thread:$0]  %s34, 1024, %s36, [#allocation6], 64, 64, 4
    $region9: #{tpu_custom_call.1} parent=1 // pred_fallthru
      _
    // Predicated region
    $region10: #{tpu_custom_call.1} parent=1 // pred_check
      _
    $region11: #{tpu_custom_call.1} parent=1 // pred_check_branch
      %43 = sbr.rel (0) target = $region13
    $region12: #{tpu_custom_call.1} parent=1 // pred_region
      _
    $region13: #{tpu_custom_call.1} parent=1 // pred_fallthru
      _
    // Predicated region
    $region14: #{tpu_custom_call.1} parent=1 // pred_check
      _
    $region15: #{tpu_custom_call.1} parent=1 // pred_check_branch
      %45 = sbr.rel (0) target = $region17
    $region16: #{tpu_custom_call.1} parent=1 // pred_region
      %47 = vsyncadd [#allocation6], 0
      %s48 = sshll.u32 %s3, 4
      %s49 = int_to_ptr.hbm [resolvable:$true] %s48
      %s50 = sshll.u32 [#allocation7], 4
      %s51 = int_to_ptr.vmem [resolvable:$true] %s50
      %56 = dma.hbm_to_vmem [thread:$0]  %s49, 1024, %s51, [#allocation6], 64, 64, 4
    $region17: #{tpu_custom_call.1} parent=1 // pred_fallthru
      _
    // Predicated region
    $region18: #{tpu_custom_call.1} parent=1 // pred_check
      _
    $region19: #{tpu_custom_call.1} parent=1 // pred_check_branch
      %58 = sbr.rel (0) target = $region21
    $region20: #{tpu_custom_call.1} parent=1 // pred_region
      _
    $region21: #{tpu_custom_call.1} parent=1 // pred_fallthru
      _
    // Predicated region
    $region22: #{tpu_custom_call.1} parent=1 // pred_check
      _
    $region23: #{tpu_custom_call.1} parent=1 // pred_check_branch
      %60 = sbr.rel (0) target = $region25
    $region24: #{tpu_custom_call.1} parent=1 // pred_region
      %62 = vsyncadd [#allocation9], 0
      %s63 = sshll.u32 %s5, 4
      %s64 = int_to_ptr.hbm [resolvable:$true] %s63
      %s65 = sshll.u32 [#allocation8], 4
      %s66 = int_to_ptr.vmem [resolvable:$true] %s65
      %71 = dma.hbm_to_vmem [thread:$0]  %s64, 1024, %s66, [#allocation9], 64, 64, 4
    $region25: #{tpu_custom_call.1} parent=1 // pred_fallthru
      _
    // Predicated region
    $region26: #{tpu_custom_call.1} parent=1 // pred_check
      _
    $region27: #{tpu_custom_call.1} parent=1 // pred_check_branch
      %73 = sbr.rel (0) target = $region29
    $region28: #{tpu_custom_call.1} parent=1 // pred_region
      _
    $region29: #{tpu_custom_call.1} parent=1 // pred_fallthru
      _
    // Predicated region
    $region30: #{tpu_custom_call.1} parent=1 // pred_check
      _
    $region31: #{tpu_custom_call.1} parent=1 // pred_check_branch
      %75 = sbr.rel (0) target = $region33
    $region32: #{tpu_custom_call.1} parent=1 // pred_region
      %77 = vsyncadd [#allocation9], 0
      %s78 = sshll.u32 %s7, 4
      %s79 = int_to_ptr.hbm [resolvable:$true] %s78
      %s80 = sshll.u32 [#allocation10], 4
      %s81 = int_to_ptr.vmem [resolvable:$true] %s80
      %86 = dma.hbm_to_vmem [thread:$0]  %s79, 1024, %s81, [#allocation9], 64, 64, 4
    $region33: #{tpu_custom_call.1} parent=1 // pred_fallthru
      _
    // Predicated region
    $region34: #{tpu_custom_call.1} parent=1 // pred_check
      _
    $region35: #{tpu_custom_call.1} parent=1 // pred_check_branch
      %88 = sbr.rel (0) target = $region37
    $region36: #{tpu_custom_call.1} parent=1 // pred_region
      _
    $region37: #{tpu_custom_call.1} parent=1 // pred_fallthru
      _
    // Predicated region
    $region38: #{tpu_custom_call.1} parent=1 // pred_check
      _
    $region39: #{tpu_custom_call.1} parent=1 // pred_check_branch
      %90 = sbr.rel (0) target = $region41
    $region40: #{tpu_custom_call.1} parent=1 // pred_region
      %92 = dma.done [#allocation3], 128
    $region41: #{tpu_custom_call.1} parent=1 // pred_fallthru
      _
    // Predicated region
    $region42: #{tpu_custom_call.1} parent=1 // pred_check
      _
    $region43: #{tpu_custom_call.1} parent=1 // pred_check_branch
      %94 = sbr.rel (0) target = $region45
    $region44: #{tpu_custom_call.1} parent=1 // pred_region
      %96 = dma.done [#allocation6], 1024
    $region45: #{tpu_custom_call.1} parent=1 // pred_fallthru
      _
    // Predicated region
    $region46: #{tpu_custom_call.1} parent=1 // pred_check
      _
    $region47: #{tpu_custom_call.1} parent=1 // pred_check_branch
      %98 = sbr.rel (0) target = $region49
    $region48: #{tpu_custom_call.1} parent=1 // pred_region
      %100 = dma.done [#allocation6], 1024
    $region49: #{tpu_custom_call.1} parent=1 // pred_fallthru
      _
    // Predicated region
    $region50: #{tpu_custom_call.1} parent=1 // pred_check
      _
    $region51: #{tpu_custom_call.1} parent=1 // pred_check_branch
      %102 = sbr.rel (0) target = $region53
    $region52: #{tpu_custom_call.1} parent=1 // pred_region
      %104 = dma.done [#allocation9], 1024
    $region53: #{tpu_custom_call.1} parent=1 // pred_fallthru
      _
    // Predicated region
    $region54: #{tpu_custom_call.1} parent=1 // pred_check
      _
    $region55: #{tpu_custom_call.1} parent=1 // pred_check_branch
      %106 = sbr.rel (0) target = $region57
    $region56: #{tpu_custom_call.1} parent=1 // pred_region
      %108 = dma.done [#allocation9], 1024
    $region57: #{tpu_custom_call.1} parent=1 // pred_fallthru
      _
    %v109 = vld [vmem:[#allocation2] sm:$0xff]
    %v110 = vld [vmem:[#allocation5] sm:$0xf]
    %v111 = vld [vmem:[#allocation5 + $0x4] sm:$0xf]
    %v112 = vld [vmem:[#allocation5 + $0x8] sm:$0xf]
    %v113 = vld [vmem:[#allocation5 + $0xc] sm:$0xf]
    %v114 = vld [vmem:[#allocation5 + $0x10] sm:$0xf]
    %v115 = vld [vmem:[#allocation5 + $0x14] sm:$0xf]
    %v116 = vld [vmem:[#allocation5 + $0x18] sm:$0xf]
    %v117 = vld [vmem:[#allocation5 + $0x1c] sm:$0xf]
    %v118 = vld [vmem:[#allocation5 + $0x20] sm:$0xf]
    %v119 = vld [vmem:[#allocation5 + $0x24] sm:$0xf]
    %v120 = vld [vmem:[#allocation5 + $0x28] sm:$0xf]
    %v121 = vld [vmem:[#allocation5 + $0x2c] sm:$0xf]
    %v122 = vld [vmem:[#allocation5 + $0x30] sm:$0xf]
    %v123 = vld [vmem:[#allocation5 + $0x34] sm:$0xf]
    %v124 = vld [vmem:[#allocation5 + $0x38] sm:$0xf]
    %v125 = vld [vmem:[#allocation5 + $0x3c] sm:$0xf]
    %v126 = vld [vmem:[%s2] sm:$0x1]
    %v127 = vpack.c.bf16 %v109, %v109
    %v129 = vperm.slane %v126, 0
    %v147 = vunpack.c.l.b16 %v110
    %v148 = vunpack.c.l.b16 %v111
    %v149 = vunpack.c.l.b16 %v112
    %v150 = vunpack.c.l.b16 %v113
    %v151 = vunpack.c.l.b16 %v114
    %v152 = vunpack.c.l.b16 %v115
    %v153 = vunpack.c.l.b16 %v116
    %v154 = vunpack.c.l.b16 %v117
    %v155 = vunpack.c.l.b16 %v118
    %v156 = vunpack.c.l.b16 %v119
    %v157 = vunpack.c.l.b16 %v120
    %v158 = vunpack.c.l.b16 %v121
    %v159 = vunpack.c.l.b16 %v122
    %v160 = vunpack.c.l.b16 %v123
    %v161 = vunpack.c.l.b16 %v124
    %v162 = vunpack.c.l.b16 %v125
    %v163 = vpack.c.b16 %v148, %v147
    %v164 = vpack.c.b16 %v150, %v149
    %v165 = vpack.c.b16 %v152, %v151
    %v166 = vpack.c.b16 %v154, %v153
    %v167 = vpack.c.b16 %v156, %v155
    %v168 = vpack.c.b16 %v158, %v157
    %v169 = vpack.c.b16 %v160, %v159
    %v170 = vpack.c.b16 %v162, %v161
    %179 = vmatpush.bf16.msra.mxu0 %v170
    %180 = vmatpush.bf16.msra.mxu0 %v169
    %181 = vmatpush.bf16.msra.mxu0 %v168
    %182 = vmatpush.bf16.msra.mxu0 %v167
    %183 = vmatpush.bf16.msra.mxu0 %v166
    %184 = vmatpush.bf16.msra.mxu0 %v165
    %185 = vmatpush.bf16.msra.mxu0 %v164
    %186 = vmatpush.bf16.msra.mxu0 %v163
    %187 = vmatmul.bf16.gmra.mxu0 %v127
    %v188 = vpop.f32.mrf.mxu0
    %v189 = vadd.f32 %v129, %v188
    %v190 = vpop.f32.mrf.mxu0
    %191 = vdwg.mxu0
    %v192 = vmax.f32 %v189, 0.0
    %v193 = vld [vmem:[#allocation7] sm:$0xf]
    %v194 = vld [vmem:[#allocation7 + $0x4] sm:$0xf]
    %v195 = vld [vmem:[#allocation7 + $0x8] sm:$0xf]
    %v196 = vld [vmem:[#allocation7 + $0xc] sm:$0xf]
    %v197 = vld [vmem:[#allocation7 + $0x10] sm:$0xf]
    %v198 = vld [vmem:[#allocation7 + $0x14] sm:$0xf]
    %v199 = vld [vmem:[#allocation7 + $0x18] sm:$0xf]
    %v200 = vld [vmem:[#allocation7 + $0x1c] sm:$0xf]
    %v201 = vld [vmem:[#allocation7 + $0x20] sm:$0xf]
    %v202 = vld [vmem:[#allocation7 + $0x24] sm:$0xf]
    %v203 = vld [vmem:[#allocation7 + $0x28] sm:$0xf]
    %v204 = vld [vmem:[#allocation7 + $0x2c] sm:$0xf]
    %v205 = vld [vmem:[#allocation7 + $0x30] sm:$0xf]
    %v206 = vld [vmem:[#allocation7 + $0x34] sm:$0xf]
    %v207 = vld [vmem:[#allocation7 + $0x38] sm:$0xf]
    %v208 = vld [vmem:[#allocation7 + $0x3c] sm:$0xf]
    %v209 = vld [vmem:[%s4] sm:$0x1]
    %v210 = vpack.c.bf16 %v192, %v192
    %v212 = vperm.slane %v209, 0
    %v230 = vunpack.c.l.b16 %v193
    %v231 = vunpack.c.l.b16 %v194
    %v232 = vunpack.c.l.b16 %v195
    %v233 = vunpack.c.l.b16 %v196
    %v234 = vunpack.c.l.b16 %v197
    %v235 = vunpack.c.l.b16 %v198
    %v236 = vunpack.c.l.b16 %v199
    %v237 = vunpack.c.l.b16 %v200
    %v238 = vunpack.c.l.b16 %v201
    %v239 = vunpack.c.l.b16 %v202
    %v240 = vunpack.c.l.b16 %v203
    %v241 = vunpack.c.l.b16 %v204
    %v242 = vunpack.c.l.b16 %v205
    %v243 = vunpack.c.l.b16 %v206
    %v244 = vunpack.c.l.b16 %v207
    %v245 = vunpack.c.l.b16 %v208
    %v246 = vpack.c.b16 %v231, %v230
    %v247 = vpack.c.b16 %v233, %v232
    %v248 = vpack.c.b16 %v235, %v234
    %v249 = vpack.c.b16 %v237, %v236
    %v250 = vpack.c.b16 %v239, %v238
    %v251 = vpack.c.b16 %v241, %v240
    %v252 = vpack.c.b16 %v243, %v242
    %v253 = vpack.c.b16 %v245, %v244
    %262 = vmatpush.bf16.msra.mxu0 %v253
    %263 = vmatpush.bf16.msra.mxu0 %v252
    %264 = vmatpush.bf16.msra.mxu0 %v251
    %265 = vmatpush.bf16.msra.mxu0 %v250
    %266 = vmatpush.bf16.msra.mxu0 %v249
    %267 = vmatpush.bf16.msra.mxu0 %v248
    %268 = vmatpush.bf16.msra.mxu0 %v247
    %269 = vmatpush.bf16.msra.mxu0 %v246
    %270 = vmatmul.bf16.gmra.mxu0 %v210
    %v271 = vpop.f32.mrf.mxu0
    %v272 = vadd.f32 %v212, %v271
    %v273 = vpop.f32.mrf.mxu0
    %274 = vdwg.mxu0
    %v275 = vmul.f32 %v272, %v272
    %276 = vadd.xlane.f32.xlu0 %v275
    %v277 = vpop.xlane.xlu0 %276
    %v278 = vmax.f32 %v277, 1e-24
    %v279 = vrsqrt.pop %v278
    %v280 = vmul.f32 %v279, %v278
    %v281 = vmul.f32 %v280, %v279
    %v282 = vmul.f32 0.5, %v281
    %v283 = vsub.f32 1.5, %v282
    %v284 = vmul.f32 %v279, %v283
    %vm285 = vweird.f32 %v278
    %vm286 = vweird.f32 %v279
    %vm287 = vmor %vm285, %vm286
    %v288 = vsel %vm287, %v279, %v284
    %v289 = vmul.f32 %v272, %v288
    %v290 = vld [vmem:[#allocation8] sm:$0xf]
    %v291 = vld [vmem:[#allocation8 + $0x4] sm:$0xf]
    %v292 = vld [vmem:[#allocation8 + $0x8] sm:$0xf]
    %v293 = vld [vmem:[#allocation8 + $0xc] sm:$0xf]
    %v294 = vld [vmem:[#allocation8 + $0x10] sm:$0xf]
    %v295 = vld [vmem:[#allocation8 + $0x14] sm:$0xf]
    %v296 = vld [vmem:[#allocation8 + $0x18] sm:$0xf]
    %v297 = vld [vmem:[#allocation8 + $0x1c] sm:$0xf]
    %v298 = vld [vmem:[#allocation8 + $0x20] sm:$0xf]
    %v299 = vld [vmem:[#allocation8 + $0x24] sm:$0xf]
    %v300 = vld [vmem:[#allocation8 + $0x28] sm:$0xf]
    %v301 = vld [vmem:[#allocation8 + $0x2c] sm:$0xf]
    %v302 = vld [vmem:[#allocation8 + $0x30] sm:$0xf]
    %v303 = vld [vmem:[#allocation8 + $0x34] sm:$0xf]
    %v304 = vld [vmem:[#allocation8 + $0x38] sm:$0xf]
    %v305 = vld [vmem:[#allocation8 + $0x3c] sm:$0xf]
    %v306 = vld [vmem:[%s6] sm:$0x1]
    %v307 = vpack.c.bf16 %v289, %v289
    %v309 = vperm.slane %v306, 0
    %v327 = vunpack.c.l.b16 %v290
    %v328 = vunpack.c.l.b16 %v291
    %v329 = vunpack.c.l.b16 %v292
    %v330 = vunpack.c.l.b16 %v293
    %v331 = vunpack.c.l.b16 %v294
    %v332 = vunpack.c.l.b16 %v295
    %v333 = vunpack.c.l.b16 %v296
    %v334 = vunpack.c.l.b16 %v297
    %v335 = vunpack.c.l.b16 %v298
    %v336 = vunpack.c.l.b16 %v299
    %v337 = vunpack.c.l.b16 %v300
    %v338 = vunpack.c.l.b16 %v301
    %v339 = vunpack.c.l.b16 %v302
    %v340 = vunpack.c.l.b16 %v303
    %v341 = vunpack.c.l.b16 %v304
    %v342 = vunpack.c.l.b16 %v305
    %v343 = vpack.c.b16 %v328, %v327
    %v344 = vpack.c.b16 %v330, %v329
    %v345 = vpack.c.b16 %v332, %v331
    %v346 = vpack.c.b16 %v334, %v333
    %v347 = vpack.c.b16 %v336, %v335
    %v348 = vpack.c.b16 %v338, %v337
    %v349 = vpack.c.b16 %v340, %v339
    %v350 = vpack.c.b16 %v342, %v341
    %359 = vmatpush.bf16.msra.mxu0 %v350
    %360 = vmatpush.bf16.msra.mxu0 %v349
    %361 = vmatpush.bf16.msra.mxu0 %v348
    %362 = vmatpush.bf16.msra.mxu0 %v347
    %363 = vmatpush.bf16.msra.mxu0 %v346
    %364 = vmatpush.bf16.msra.mxu0 %v345
    %365 = vmatpush.bf16.msra.mxu0 %v344
    %366 = vmatpush.bf16.msra.mxu0 %v343
    %367 = vmatmul.bf16.gmra.mxu0 %v307
    %v368 = vpop.f32.mrf.mxu0
    %v369 = vadd.f32 %v309, %v368
    %v370 = vpop.f32.mrf.mxu0
    %371 = vdwg.mxu0
    %v372 = vmax.f32 %v369, 0.0
    %v373 = vld [vmem:[#allocation10] sm:$0xf]
    %v374 = vld [vmem:[#allocation10 + $0x4] sm:$0xf]
    %v375 = vld [vmem:[#allocation10 + $0x8] sm:$0xf]
    %v376 = vld [vmem:[#allocation10 + $0xc] sm:$0xf]
    %v377 = vld [vmem:[#allocation10 + $0x10] sm:$0xf]
    %v378 = vld [vmem:[#allocation10 + $0x14] sm:$0xf]
    %v379 = vld [vmem:[#allocation10 + $0x18] sm:$0xf]
    %v380 = vld [vmem:[#allocation10 + $0x1c] sm:$0xf]
    %v381 = vld [vmem:[#allocation10 + $0x20] sm:$0xf]
    %v382 = vld [vmem:[#allocation10 + $0x24] sm:$0xf]
    %v383 = vld [vmem:[#allocation10 + $0x28] sm:$0xf]
    %v384 = vld [vmem:[#allocation10 + $0x2c] sm:$0xf]
    %v385 = vld [vmem:[#allocation10 + $0x30] sm:$0xf]
    %v386 = vld [vmem:[#allocation10 + $0x34] sm:$0xf]
    %v387 = vld [vmem:[#allocation10 + $0x38] sm:$0xf]
    %v388 = vld [vmem:[#allocation10 + $0x3c] sm:$0xf]
    %v389 = vld [vmem:[%s8] sm:$0x1]
    %v390 = vpack.c.bf16 %v372, %v372
    %v392 = vperm.slane %v389, 0
    %v410 = vunpack.c.l.b16 %v373
    %v411 = vunpack.c.l.b16 %v374
    %v412 = vunpack.c.l.b16 %v375
    %v413 = vunpack.c.l.b16 %v376
    %v414 = vunpack.c.l.b16 %v377
    %v415 = vunpack.c.l.b16 %v378
    %v416 = vunpack.c.l.b16 %v379
    %v417 = vunpack.c.l.b16 %v380
    %v418 = vunpack.c.l.b16 %v381
    %v419 = vunpack.c.l.b16 %v382
    %v420 = vunpack.c.l.b16 %v383
    %v421 = vunpack.c.l.b16 %v384
    %v422 = vunpack.c.l.b16 %v385
    %v423 = vunpack.c.l.b16 %v386
    %v424 = vunpack.c.l.b16 %v387
    %v425 = vunpack.c.l.b16 %v388
    %v426 = vpack.c.b16 %v411, %v410
    %v427 = vpack.c.b16 %v413, %v412
    %v428 = vpack.c.b16 %v415, %v414
    %v429 = vpack.c.b16 %v417, %v416
    %v430 = vpack.c.b16 %v419, %v418
    %v431 = vpack.c.b16 %v421, %v420
    %v432 = vpack.c.b16 %v423, %v422
    %v433 = vpack.c.b16 %v425, %v424
    %442 = vmatpush.bf16.msra.mxu0 %v433
    %443 = vmatpush.bf16.msra.mxu0 %v432
    %444 = vmatpush.bf16.msra.mxu0 %v431
    %445 = vmatpush.bf16.msra.mxu0 %v430
    %446 = vmatpush.bf16.msra.mxu0 %v429
    %447 = vmatpush.bf16.msra.mxu0 %v428
    %448 = vmatpush.bf16.msra.mxu0 %v427
    %449 = vmatpush.bf16.msra.mxu0 %v426
    %450 = vmatmul.bf16.gmra.mxu0 %v390
    %v451 = vpop.f32.mrf.mxu0
    %v452 = vadd.f32 %v392, %v451
    %v453 = vpop.f32.mrf.mxu0
    %454 = vdwg.mxu0
    %455 = vst [vmem:[#allocation11] sm:$0xff] %v452
    // Predicated region
    $region58: #{tpu_custom_call.1} parent=1 // pred_check
      _
    $region59: #{tpu_custom_call.1} parent=1 // pred_check_branch
      %457 = sbr.rel (0) target = $region61
    $region60: #{tpu_custom_call.1} parent=1 // pred_region
      %459 = vsyncadd [#allocation4], 0
      %s461 = sshll.u32 [#allocation11], 4
      %s462 = int_to_ptr.vmem [resolvable:$true] %s461
      %s463 = sshll.u32 %s9, 4
      %s464 = int_to_ptr.hbm [resolvable:$true] %s463
      %466 = dma.vmem_to_hbm [thread:$0]  %s462, 128, %s464, [#allocation4]
    $region61: #{tpu_custom_call.1} parent=1 // pred_fallthru
      _
    // Predicated region
    $region62: #{tpu_custom_call.1} parent=1 // pred_check
      _
    $region63: #{tpu_custom_call.1} parent=1 // pred_check_branch
      %468 = sbr.rel (0) target = $region65
    $region64: #{tpu_custom_call.1} parent=1 // pred_region
      %470 = dma.done [#allocation4], 128
    $region65: #{tpu_custom_call.1} parent=1 // pred_fallthru
      _
    %471 = vsyncpa [#allocation3], 1
    %472 = vsyncpa [#allocation6], 1
    %473 = vsyncpa [#allocation9], 1
    %474 = vsyncpa [#allocation4], 1

</llo_original>
